<compile_context>
chip_gen: v6e
topology: v6e:2x2x1
jax: 0.10.0
libtpu: 0.0.40
codegen_flags: <defaults>
</compile_context>

<pallas_src>
import math

import jax
import jax.numpy as jnp
from jax.experimental import pallas as pl
from jax.experimental.pallas import tpu as pltpu


def _rep_n31_kernel(x_ref, w_ref, b_ref, o_ref):
    """One (batch, width-tile, row-tile) grid step: fused conv + bias + ReLU.

    x_ref: (tile_h, K3)  bf16 — kh-stacked im2row rows of the width tile (+halo).
    w_ref: (K3, Npt)     bf16 — banded weights, (kh, wi, ci) x (w, co).
    b_ref: (1, Npt)      f32  — bias tiled over the width tile.
    o_ref: (tile_h, Npt) bf16 — lane-dense output rows.
    """
    acc = jnp.dot(x_ref[...], w_ref[...], preferred_element_type=jnp.float32)
    o_ref[...] = jnp.maximum(acc + b_ref[...], 0.0).astype(o_ref.dtype)


def _fuse_conv_bn(w, b, gamma, beta, mean, var, eps=1e-5):
    """Fold eval-mode BatchNorm into conv weight/bias (exact algebraic rewrite)."""
    t = gamma / jnp.sqrt(var + eps)                      # (Cout,)
    return w * t[:, None, None, None], beta + (b - mean) * t


def _vmem_capacity_bytes():
    try:
        cap = getattr(pltpu.get_tpu_info(), "vmem_capacity_bytes", None)
        if cap:
            return int(cap)
    except Exception:
        pass
    return 64 * 1024 * 1024                              # v7x-conservative default


def _round_up(x, m):
    return -(-x // m) * m


def _cout_padded(wt, cout):
    """Channel padding so Wt*Cout_p is lane-dense; prefer 256-wide when cheap."""
    cp128 = _round_up(cout, 128 // math.gcd(wt, 128))
    cp256 = _round_up(cout, 256 // math.gcd(wt, 256))
    # Use the 256 multiple (fills both MXU halves on v6e/v7x) only if it costs
    # <= 12.5% extra padded channels; otherwise keep the 128 multiple (v5e MXU).
    return cp256 if cp256 * 8 <= cp128 * 9 else cp128


def _resident_spec(block_shape, index_map):
    """Constant-index block: single buffer (no useless 2x VMEM), with fallback."""
    try:
        return pl.BlockSpec(block_shape, index_map, pipeline_mode=pl.Buffered(1))
    except Exception:                                    # no pipeline_mode support
        return pl.BlockSpec(block_shape, index_map)


def rep_n31_forward(x_nchw, p):
    """Pallas implementation of repN31.forward (BN eval, branches folded)."""
    N, Cin, H, W = x_nchw.shape

    # ---- fold BN into both convs, then fold the 1x1 into the 3x3 center tap ----
    w3, b3 = _fuse_conv_bn(p["w3"], p["b3"], p["g3"], p["beta3"], p["m3"], p["v3"])
    w1, b1 = _fuse_conv_bn(p["w1"], p["b1"], p["g1"], p["beta1"], p["m1"], p["v1"])
    Cout = w3.shape[0]
    k_eff = w3.at[:, :, 1, 1].add(w1[:, :, 0, 0])        # (Cout, Cin, 3, 3)
    bias = b3 + b1                                       # (Cout,)

    # ---- tiling choices (generation-aware VMEM budget) ----
    vmem_cap = _vmem_capacity_bytes()
    budget = int(0.70 * vmem_cap)

    def est_bytes(wt, cp, th):
        k3 = 3 * (wt + 2) * Cin
        npt = wt * cp
        # Weights/bias budgeted at 2x in case Buffered(1) is unavailable; the
        # streamed x / out blocks are double-buffered by the pipeline.
        return 2 * (k3 * npt * 2 + npt * 4 + th * k3 * 2 + th * npt * 2)

    # Width tile: largest divisor of W whose resident weight band leaves room.
    Wt = 1
    for d in sorted((d for d in range(1, W + 1) if W % d == 0), reverse=True):
        if 2 * (3 * (d + 2) * Cin) * (d * _cout_padded(d, Cout)) * 2 <= budget // 2:
            Wt = d
            break
    Cout_p = _cout_padded(Wt, Cout)
    WB = W // Wt
    K3 = 3 * (Wt + 2) * Cin
    Npt = Wt * Cout_p

    # Row tile: largest sublane-aligned divisor of H that fits VMEM (usually H).
    row_divs = [d for d in range(H, 0, -1) if H % d == 0 and (d == H or d % 8 == 0)]
    tile_h = row_divs[-1]
    for d in row_divs:
        if est_bytes(Wt, Cout_p, d) <= budget:
            tile_h = d
            break
    if N == 1:
        # Give v7x's second TensorCore row-parallel work; one extra grid step is
        # negligible (~0.35us) on the single-TC v5e/v6e.
        split = [d for d in row_divs if d % 8 == 0 and 2 * d <= H]
        if split:
            tile_h = min(tile_h, split[0])
    R = H // tile_h

    # ---- banded weights: one bf16 slab, identical for every width tile --------
    # wb[kh*(Wt+2)*Cin + wi*Cin + ci, w*Cout_p + co] = k_eff[co, ci, kh, wi - w]
    kt = jnp.transpose(k_eff, (2, 3, 1, 0))              # (kh, kw, ci, co)
    kt = jnp.pad(kt, ((0, 0), (0, 0), (0, 0), (0, Cout_p - Cout))).astype(jnp.bfloat16)
    wi_ix = jnp.arange(Wt + 2)[:, None]
    w_ix = jnp.arange(Wt)[None, :]
    kw_off = wi_ix - w_ix                                # (Wt+2, Wt)
    valid = (kw_off >= 0) & (kw_off < 3)
    band = jnp.where(valid[None, :, :, None, None],
                     kt[:, jnp.clip(kw_off, 0, 2)],      # (3, Wt+2, Wt, ci, co)
                     jnp.zeros((), jnp.bfloat16))
    wb = jnp.transpose(band, (0, 1, 3, 2, 4)).reshape(K3, Npt)

    b_tiled = jnp.tile(jnp.pad(bias, (0, Cout_p - Cout)), Wt).reshape(1, Npt)
    b_tiled = b_tiled.astype(jnp.float32)

    # ---- input: NHWC bf16, zero-padded, width tiles (+halo), kh-stacked -------
    x_nhwc = jnp.transpose(x_nchw, (0, 2, 3, 1)).astype(jnp.bfloat16)
    x_pad = jnp.pad(x_nhwc, ((0, 0), (1, 1), (1, 1), (0, 0)))
    if WB == 1:
        xg = x_pad.reshape(N, H + 2, 1, (W + 2) * Cin)
    else:
        col = (jnp.arange(WB)[:, None] * Wt + jnp.arange(Wt + 2)[None, :]).reshape(-1)
        xg = x_pad[:, :, col, :].reshape(N, H + 2, WB, (Wt + 2) * Cin)
    x_im2row = jnp.concatenate([xg[:, kh:kh + H] for kh in range(3)], axis=-1)
    x_im2row = jnp.transpose(x_im2row, (0, 2, 1, 3))     # (N, WB, H, K3)

    vmem_limit = est_bytes(Wt, Cout_p, tile_h)
    vmem_limit = int(min(max(vmem_limit + vmem_limit // 4, 32 * 1024 * 1024),
                         int(0.85 * vmem_cap)))

    out = pl.pallas_call(
        _rep_n31_kernel,
        out_shape=jax.ShapeDtypeStruct((N, WB, H, Npt), jnp.bfloat16),
        grid_spec=pltpu.PrefetchScalarGridSpec(
            num_scalar_prefetch=0,
            grid=(N, WB, R),
            in_specs=[
                pl.BlockSpec((None, None, tile_h, K3),
                             lambda n, wbi, r: (n, wbi, r, 0)),
                _resident_spec((K3, Npt), lambda n, wbi, r: (0, 0)),
                _resident_spec((1, Npt), lambda n, wbi, r: (0, 0)),
            ],
            out_specs=pl.BlockSpec((None, None, tile_h, Npt),
                                   lambda n, wbi, r: (n, wbi, r, 0)),
        ),
        compiler_params=pltpu.CompilerParams(
            dimension_semantics=("parallel", "parallel", "parallel"),
            vmem_limit_bytes=vmem_limit,
        ),
    )(x_im2row, wb, b_tiled)

    # ---- back to the module's NCHW f32 contract --------------------------------
    out = out.reshape(N, WB, H, Wt, Cout_p)[..., :Cout]
    out = jnp.transpose(out, (0, 4, 2, 1, 3)).reshape(N, Cout, H, W)
    return out.astype(jnp.float32)


def rep_n31_reference(x_nchw, p):
    """Pure-JAX reference (lax conv, same bf16-in / f32-accumulate numerics)."""
    w3, b3 = _fuse_conv_bn(p["w3"], p["b3"], p["g3"], p["beta3"], p["m3"], p["v3"])
    w1, b1 = _fuse_conv_bn(p["w1"], p["b1"], p["g1"], p["beta1"], p["m1"], p["v1"])
    k_eff = w3.at[:, :, 1, 1].add(w1[:, :, 0, 0])
    bias = b3 + b1
    y = jax.lax.conv_general_dilated(
        x_nchw.astype(jnp.bfloat16), k_eff.astype(jnp.bfloat16),
        (1, 1), ((1, 1), (1, 1)),
        dimension_numbers=("NCHW", "OIHW", "NCHW"),
        preferred_element_type=jnp.float32)
    return jnp.maximum(y + bias[None, :, None, None], 0.0)


def make_params(key, in_channels, out_channels):
    ks = jax.random.split(key, 12)
    return {
        # rbr_dense: Conv2d(in, out, 3, bias=True) + BN(out)
        "w3": jax.random.normal(ks[0], (out_channels, in_channels, 3, 3), jnp.float32) * 0.1,
        "b3": jax.random.normal(ks[1], (out_channels,), jnp.float32) * 0.1,
        "g3": jax.random.uniform(ks[2], (out_channels,), jnp.float32, 0.5, 1.5),
        "beta3": jax.random.normal(ks[3], (out_channels,), jnp.float32) * 0.1,
        "m3": jax.random.normal(ks[4], (out_channels,), jnp.float32) * 0.1,
        "v3": jax.random.uniform(ks[5], (out_channels,), jnp.float32, 0.5, 1.5),
        # rbr_3x3 (actually 1x1): Conv2d(in, out, 1, bias=True) + BN(out)
        "w1": jax.random.normal(ks[6], (out_channels, in_channels, 1, 1), jnp.float32) * 0.1,
        "b1": jax.random.normal(ks[7], (out_channels,), jnp.float32) * 0.1,
        "g1": jax.random.uniform(ks[8], (out_channels,), jnp.float32, 0.5, 1.5),
        "beta1": jax.random.normal(ks[9], (out_channels,), jnp.float32) * 0.1,
        "m1": jax.random.normal(ks[10], (out_channels,), jnp.float32) * 0.1,
        "v1": jax.random.uniform(ks[11], (out_channels,), jnp.float32, 0.5, 1.5),
    }


if __name__ == "__main__":
    key = jax.random.PRNGKey(0)
    k_x, k_p = jax.random.split(key)

    N, Cin, Cout, H, W = 2, 4, 8, 16, 16
    x = jax.random.normal(k_x, (N, Cin, H, W), jnp.float32)
    params = make_params(k_p, Cin, Cout)

    out = jax.block_until_ready(jax.jit(rep_n31_forward)(x, params))
    ref = jax.block_until_ready(rep_n31_reference(x, params))

    assert out.shape == (N, Cout, H, W), out.shape
    max_err = float(jnp.max(jnp.abs(out - ref)))
    assert jnp.allclose(out, ref, atol=3e-2, rtol=3e-2), max_err
    print("KERNEL_OK")
</pallas_src>

<mosaic_0001>
module attributes {stable_mosaic.version = 11 : i64} {
  func.func @_rep_n31_kernel(%arg0: i32, %arg1: i32, %arg2: i32, %arg3: memref<1x1x16x216xbf16, #tpu.memory_space<vmem>>, %arg4: memref<216x128xbf16, #tpu.memory_space<vmem>>, %arg5: memref<1x128xf32, #tpu.memory_space<vmem>>, %arg6: memref<1x1x16x128xbf16, #tpu.memory_space<vmem>>) attributes {dimension_semantics = [#tpu.dimension_semantics<parallel>, #tpu.dimension_semantics<parallel>, #tpu.dimension_semantics<parallel>], iteration_bounds = array<i64: 2, 1, 1>, scalar_prefetch = 0 : i64, scratch_operands = 0 : i64, tpu.core_type = #tpu.core_type<tc>, window_params = [{transform_indices = @transform_0, window_bounds = array<i64: 1, 1, 16, 216>}, {pipeline_mode = #tpu.pipeline_mode<synchronous>, transform_indices = @transform_1, window_bounds = array<i64: 216, 128>}, {pipeline_mode = #tpu.pipeline_mode<synchronous>, transform_indices = @transform_2, window_bounds = array<i64: 1, 128>}, {transform_indices = @transform_3, window_bounds = array<i64: 1, 1, 16, 128>}]} {
    %c0 = arith.constant 0 : index
    %c0_0 = arith.constant 0 : index
    %c0_1 = arith.constant 0 : index
    %c0_2 = arith.constant 0 : index
    %0 = vector.load %arg3[%c0, %c0_0, %c0_1, %c0_2] : memref<1x1x16x216xbf16, #tpu.memory_space<vmem>>, vector<1x1x16x216xbf16>
    %1 = vector.shape_cast %0 : vector<1x1x16x216xbf16> to vector<16x216xbf16>
    %c0_3 = arith.constant 0 : index
    %c0_4 = arith.constant 0 : index
    %2 = vector.load %arg4[%c0_3, %c0_4] : memref<216x128xbf16, #tpu.memory_space<vmem>>, vector<216x128xbf16>
    %cst = arith.constant dense<0.000000e+00> : vector<16x128xf32>
    %3 = tpu.matmul %1, %2, %cst {dimension_numbers = #tpu.dot_dimension_numbers<[1], [0], [0], [1], [0, 0, 1, 1], [], []>} : vector<16x216xbf16>, vector<216x128xbf16>, vector<16x128xf32> -> vector<16x128xf32>
    %c0_5 = arith.constant 0 : index
    %c0_6 = arith.constant 0 : index
    %4 = vector.load %arg5[%c0_5, %c0_6] : memref<1x128xf32, #tpu.memory_space<vmem>>, vector<1x128xf32>
    %5 = vector.broadcast %4 : vector<1x128xf32> to vector<16x128xf32>
    %6 = arith.addf %3, %5 : vector<16x128xf32>
    %cst_7 = arith.constant 0.000000e+00 : f32
    %7 = vector.broadcast %cst_7 : f32 to vector<16x128xf32>
    %8 = arith.maximumf %6, %7 : vector<16x128xf32>
    %9 = arith.truncf %8 : vector<16x128xf32> to vector<16x128xbf16>
    %c0_8 = arith.constant 0 : index
    %c0_9 = arith.constant 0 : index
    %c0_10 = arith.constant 0 : index
    %c0_11 = arith.constant 0 : index
    %10 = vector.load %arg6[%c0_8, %c0_9, %c0_10, %c0_11] : memref<1x1x16x128xbf16, #tpu.memory_space<vmem>>, vector<1x1x16x128xbf16>
    %11 = vector.shape_cast %10 : vector<1x1x16x128xbf16> to vector<16x128xbf16>
    %12 = vector.shape_cast %9 : vector<16x128xbf16> to vector<1x1x16x128xbf16>
    tpu.vector_store %arg6[%c0_8, %c0_9, %c0_10, %c0_11], %12 {strides = array<i32>} : memref<1x1x16x128xbf16, #tpu.memory_space<vmem>>, vector<1x1x16x128xbf16>,
    return
  }
  func.func @transform_0(%arg0: i32, %arg1: i32, %arg2: i32) -> (i32, i32, i32, i32) {
    %c0_i32 = arith.constant 0 : i32
    %c0_i32_0 = arith.constant 0 : i32
    return %arg0, %arg1, %arg2, %c0_i32 : i32, i32, i32, i32
  }
  func.func @transform_1(%arg0: i32, %arg1: i32, %arg2: i32) -> (i32, i32) {
    %c0_i32 = arith.constant 0 : i32
    %c0_i32_0 = arith.constant 0 : i32
    %c0_i32_1 = arith.constant 0 : i32
    return %c0_i32, %c0_i32_0 : i32, i32
  }
  func.func @transform_2(%arg0: i32, %arg1: i32, %arg2: i32) -> (i32, i32) {
    %c0_i32 = arith.constant 0 : i32
    %c0_i32_0 = arith.constant 0 : i32
    %c0_i32_1 = arith.constant 0 : i32
    return %c0_i32, %c0_i32_0 : i32, i32
  }
  func.func @transform_3(%arg0: i32, %arg1: i32, %arg2: i32) -> (i32, i32, i32, i32) {
    %c0_i32 = arith.constant 0 : i32
    %c0_i32_0 = arith.constant 0 : i32
    return %arg0, %arg1, %arg2, %c0_i32 : i32, i32, i32, i32
  }
}

</mosaic_0001>

<llo_original>
// kernel: tile.8
$region0: #{tile.8}
  #allocation0 [shape = 's32[1]{0}', space=sflag, size = 0x4, scoped, tag = 'scoped memory for tile.8']
  %s0 = inlined_call_operand.vmem [shape: f32[8], index: 0, kind: input, shape index: {}]
  %s1 = inlined_call_operand.vmem [shape: f32[16,8], index: 1, kind: output, shape index: {}]
  // Predicated region
  $region2: #{tile.8} parent=0 // pred_check
    _
  $region3: #{tile.8} parent=0 // pred_check_branch
    %3 = sbr.rel (0) target = $region5
  $region4: #{tile.8} parent=0 // pred_region
    _
  $region5: #{tile.8} parent=0 // pred_fallthru
    _
  %v4 = vld [vmem:[%s0] ss:$0 sm:$0xff]
  %5 = vst [vmem:[%s1] sm:$0xff] %v4
  %s6 = scalar_lea.vmem %s1, 8
  %7 = vst [vmem:[%s6] sm:$0xff] %v4

// kernel: tile.9
$region0: #{tile.9}
  %s0 = inlined_call_operand.vmem [shape: f32[16,8], index: 0, kind: input, shape index: {}]
  %s1 = inlined_call_operand.vmem [shape: f32[1,128], index: 1, kind: output, shape index: {}]
  $region1: #{tile.9} parent=0
    #allocation0 [shape = 'u8[4096]{0}', space=vmem, size = 0x1000, scoped, tag = 'scoped mem for output reshape']
    %v2 = vld [vmem:[%s0] sm:$0x1]
    %vm3 = vcmask 64512
    %4 = vst.msk [vmem:[#allocation0] sm:$0x1] %vm3, %v2
    %s5 = scalar_lea.vmem %s0, 15
    %v6 = vld [vmem:[%s5] sm:$0x1]
    %7 = vrot.lane.b32.xlu0 %v6, 120
    %v8 = vpop.permute.xlu0 %7
    %vm9 = vcmask 1048512
    %10 = vst.msk [vmem:[#allocation0] sm:$0x1] %vm9, %v8
    %s11 = scalar_lea.vmem %s0, 14
    %v12 = vld [vmem:[%s11] sm:$0x1]
    %13 = vrot.lane.b32.xlu0 %v12, 112
    %v14 = vpop.permute.xlu0 %13
    %vm15 = vcmask 982912
    %16 = vst.msk [vmem:[#allocation0] sm:$0x1] %vm15, %v14
    %s17 = scalar_lea.vmem %s0, 13
    %v18 = vld [vmem:[%s17] sm:$0x1]
    %19 = vrot.lane.b32.xlu0 %v18, 104
    %v20 = vpop.permute.xlu0 %19
    %vm21 = vcmask 917312
    %22 = vst.msk [vmem:[#allocation0] sm:$0x1] %vm21, %v20
    %s23 = scalar_lea.vmem %s0, 12
    %v24 = vld [vmem:[%s23] sm:$0x1]
    %25 = vrot.lane.b32.xlu0 %v24, 96
    %v26 = vpop.permute.xlu0 %25
    %vm27 = vcmask 851712
    %28 = vst.msk [vmem:[#allocation0] sm:$0x1] %vm27, %v26
    %s29 = scalar_lea.vmem %s0, 11
    %v30 = vld [vmem:[%s29] sm:$0x1]
    %31 = vrot.lane.b32.xlu0 %v30, 88
    %v32 = vpop.permute.xlu0 %31
    %vm33 = vcmask 786112
    %34 = vst.msk [vmem:[#allocation0] sm:$0x1] %vm33, %v32
    %s35 = scalar_lea.vmem %s0, 10
    %v36 = vld [vmem:[%s35] sm:$0x1]
    %37 = vrot.lane.b32.xlu0 %v36, 80
    %v38 = vpop.permute.xlu0 %37
    %vm39 = vcmask 720512
    %40 = vst.msk [vmem:[#allocation0] sm:$0x1] %vm39, %v38
    %s41 = scalar_lea.vmem %s0, 9
    %v42 = vld [vmem:[%s41] sm:$0x1]
    %43 = vrot.lane.b32.xlu0 %v42, 72
    %v44 = vpop.permute.xlu0 %43
    %vm45 = vcmask 654912
    %46 = vst.msk [vmem:[#allocation0] sm:$0x1] %vm45, %v44
    %s47 = scalar_lea.vmem %s0, 8
    %v48 = vld [vmem:[%s47] sm:$0x1]
    %49 = vrot.lane.b32.xlu0 %v48, 64
    %v50 = vpop.permute.xlu0 %49
    %vm51 = vcmask 589312
    %52 = vst.msk [vmem:[#allocation0] sm:$0x1] %vm51, %v50
    %s53 = scalar_lea.vmem %s0, 7
    %v54 = vld [vmem:[%s53] sm:$0x1]
    %55 = vrot.lane.b32.xlu0 %v54, 56
    %v56 = vpop.permute.xlu0 %55
    %vm57 = vcmask 523712
    %58 = vst.msk [vmem:[#allocation0] sm:$0x1] %vm57, %v56
    %s59 = scalar_lea.vmem %s0, 6
    %v60 = vld [vmem:[%s59] sm:$0x1]
    %61 = vrot.lane.b32.xlu0 %v60, 48
    %v62 = vpop.permute.xlu0 %61
    %vm63 = vcmask 458112
    %64 = vst.msk [vmem:[#allocation0] sm:$0x1] %vm63, %v62
    %s65 = scalar_lea.vmem %s0, 5
    %v66 = vld [vmem:[%s65] sm:$0x1]
    %67 = vrot.lane.b32.xlu0 %v66, 40
    %v68 = vpop.permute.xlu0 %67
    %vm69 = vcmask 392512
    %70 = vst.msk [vmem:[#allocation0] sm:$0x1] %vm69, %v68
    %s71 = scalar_lea.vmem %s0, 4
    %v72 = vld [vmem:[%s71] sm:$0x1]
    %73 = vrot.lane.b32.xlu0 %v72, 32
    %v74 = vpop.permute.xlu0 %73
    %vm75 = vcmask 326912
    %76 = vst.msk [vmem:[#allocation0] sm:$0x1] %vm75, %v74
    %s77 = scalar_lea.vmem %s0, 3
    %v78 = vld [vmem:[%s77] sm:$0x1]
    %79 = vrot.lane.b32.xlu0 %v78, 24
    %v80 = vpop.permute.xlu0 %79
    %vm81 = vcmask 261312
    %82 = vst.msk [vmem:[#allocation0] sm:$0x1] %vm81, %v80
    %s83 = scalar_lea.vmem %s0, 2
    %v84 = vld [vmem:[%s83] sm:$0x1]
    %85 = vrot.lane.b32.xlu0 %v84, 16
    %v86 = vpop.permute.xlu0 %85
    %vm87 = vcmask 195712
    %88 = vst.msk [vmem:[#allocation0] sm:$0x1] %vm87, %v86
    %s89 = scalar_lea.vmem %s0, 1
    %v90 = vld [vmem:[%s89] sm:$0x1]
    %91 = vrot.lane.b32.xlu0 %v90, 8
    %v92 = vpop.permute.xlu0 %91
    %vm93 = vcmask 130112
    %94 = vst.msk [vmem:[#allocation0] sm:$0x1] %vm93, %v92
    %s96 = sshll.u32 1, 1
    %s97 = ssub.s32 %s96, 1
    %v99 = vld [vmem:[#allocation0] sm:%s97]
    %s100 = sshll.u32 1, 1
    %s101 = ssub.s32 %s100, 1
    %102 = vst [vmem:[%s1] sm:%s101] %v99

// kernel: rep_n31_forward.1
$region0: #{rep_n31_forward.1}
  #allocation0 [shape = 'u32[]', space=smem, size = 0x4, offset = 0x4, fixed_abs, tag = 'smem constant byte address 0x4 - core index']
  #allocation1 [shape = 'u32[144,128]{1,0:T(1,128)}', space=vmem, size = 0x12000, scoped, tag = 'internal scratch']
  %s0 = inlined_call_operand.vmem [shape: bf16[2,1,16,216], index: 0, kind: input, shape index: {}]
  %s1 = inlined_call_operand.vmem [shape: bf16[216,128], index: 1, kind: input, shape index: {}]
  %s2 = inlined_call_operand.vmem [shape: f32[1,128], index: 2, kind: input, shape index: {}]
  %s3 = inlined_call_operand.vmem [shape: bf16[2,1,16,128], index: 3, kind: output, shape index: {}]
  %s4 = sld [smem:[#allocation0]]
  $region45: #{rep_n31_forward.1} parent=0
    _
  %s6 = ssub.s32 1, %s4
  %s7 = scalar_select 0, %s6, %s4
  loop: start=0, step=1, limit=4
  $region2: #{rep_n31_forward.1} parent=0 // loop_pre_header
    _
  $region3: #{rep_n31_forward.1} parent=0 // loop_header
    %s9 = sphi 0, %s13
    %p10 = scmp.ge.s32.totalorder %s9, 4
    %s16 = sphi 0, %s35
    %s17 = sphi 0, %s31
    %s18 = sphi 0, %s27
    %s19 = sphi 0, %s16
    %s20 = sphi 0, %s17
    %s21 = sphi 0, %s18
    %s22 = sphi 0, %s19
    %s23 = sphi 0, %s20
    %s24 = sphi 0, %s21
    %s42 = sphi 0, %s44
    %s45 = sphi 0, %s42
    %s46 = sphi 0, %s45
    %s62 = sphi 0, %s46
    %s66 = sphi 0, %s66
    %s68 = sphi 0, %s66
    %s69 = sphi 0, %s68
    %s83 = sphi 0, %s69
    %s87 = sphi 0, %s87
    %s89 = sphi 0, %s87
    %s90 = sphi 0, %s89
    %s104 = sphi 0, %s90
    %s114 = sphi 0, %s116
    %s117 = sphi 0, %s114
    %s118 = sphi 0, %s117
    %s134 = sphi 0, %s118
  $region4: #{rep_n31_forward.1} parent=0 // loop_header_branch
    %12 = sbr.rel (%p10) target = $region8
  $region5: #{rep_n31_forward.1} parent=0 // loop_body
    %s14 = ssub.s32 %s9, 1
    %s15 = ssub.s32 %s9, 2
    %s25 = sadd.s32 1, %s18
    %p26 = scmp.ge.s32.totalorder %s25, 1
    %s27 = scalar_select %p26, 0, %s25
    %s28 = sadd.s32 1, %s17
    %s29 = scalar_select %p26, %s28, %s17
    %p30 = scmp.ge.s32.totalorder %s29, 1
    %s31 = scalar_select %p30, 0, %s29
    %s32 = sadd.s32 1, %s16
    %s33 = scalar_select %p30, %s32, %s16
    %p34 = scmp.ge.s32.totalorder %s33, 2
    %s35 = scalar_select %p34, 0, %s33
    %s36 = ssub.s32 %s16, %s35
    %s37 = ssub.s32 %s17, %s31
    %s38 = sor.u32 %s36, %s37
    %s39 = ssub.s32 %s18, %s27
    %s40 = sor.u32 %s38, %s39
    %p41 = scmp.eq.s32.totalorder %s40, 0
    %s43 = sadd.s32 %s42, 1
    %s44 = scalar_select %p41, %s42, %s43
    %p47 = pneg %p41
    %p48 = scmp.eq.s32.totalorder %s9, 1
    %p49 = por %p47, %p48
    %p50 = scmp.ne.s32.totalorder %s42, %s45
    %p51 = scmp.eq.s32.totalorder %s9, 0
    %p52 = por %p50, %p51
    %p53 = scmp.ne.s32.totalorder %s42, %s45
    %p54 = scmp.eq.s32.totalorder %s14, 1
    %p55 = por %p53, %p54
    %p56 = scmp.ne.s32.totalorder %s45, %s46
    %p57 = scmp.eq.s32.totalorder %s14, 0
    %p58 = por %p56, %p57
    %p59 = scmp.ne.s32.totalorder %s45, %s46
    %p60 = scmp.eq.s32.totalorder %s15, 1
    %p61 = por %p59, %p60
    %p63 = scmp.ne.s32.totalorder %s46, %s62
    %p64 = scmp.eq.s32.totalorder %s15, 0
    %p65 = por %p63, %p64
    %s67 = sadd.s32 %s66, 1
    %p70 = scmp.eq.s32.totalorder %s9, 1
    %p71 = scmp.ne.s32.totalorder %s66, %s68
    %p72 = scmp.eq.s32.totalorder %s9, 0
    %p73 = por %p71, %p72
    %p74 = scmp.ne.s32.totalorder %s66, %s68
    %p75 = scmp.eq.s32.totalorder %s14, 1
    %p76 = por %p74, %p75
    %p77 = scmp.ne.s32.totalorder %s68, %s69
    %p78 = scmp.eq.s32.totalorder %s14, 0
    %p79 = por %p77, %p78
    %p80 = scmp.ne.s32.totalorder %s68, %s69
    %p81 = scmp.eq.s32.totalorder %s15, 1
    %p82 = por %p80, %p81
    %p84 = scmp.ne.s32.totalorder %s69, %s83
    %p85 = scmp.eq.s32.totalorder %s15, 0
    %p86 = por %p84, %p85
    %s88 = sadd.s32 %s87, 1
    %p91 = scmp.eq.s32.totalorder %s9, 1
    %p92 = scmp.ne.s32.totalorder %s87, %s89
    %p93 = scmp.eq.s32.totalorder %s9, 0
    %p94 = por %p92, %p93
    %p95 = scmp.ne.s32.totalorder %s87, %s89
    %p96 = scmp.eq.s32.totalorder %s14, 1
    %p97 = por %p95, %p96
    %p98 = scmp.ne.s32.totalorder %s89, %s90
    %p99 = scmp.eq.s32.totalorder %s14, 0
    %p100 = por %p98, %p99
    %p101 = scmp.ne.s32.totalorder %s89, %s90
    %p102 = scmp.eq.s32.totalorder %s15, 1
    %p103 = por %p101, %p102
    %p105 = scmp.ne.s32.totalorder %s90, %s104
    %p106 = scmp.eq.s32.totalorder %s15, 0
    %p107 = por %p105, %p106
    %s108 = ssub.s32 %s16, %s35
    %s109 = ssub.s32 %s17, %s31
    %s110 = sor.u32 %s108, %s109
    %s111 = ssub.s32 %s18, %s27
    %s112 = sor.u32 %s110, %s111
    %p113 = scmp.eq.s32.totalorder %s112, 0
    %s115 = sadd.s32 %s114, 1
    %s116 = scalar_select %p113, %s114, %s115
    %p119 = pneg %p113
    %p120 = scmp.eq.s32.totalorder %s9, 1
    %p121 = por %p119, %p120
    %p122 = scmp.ne.s32.totalorder %s114, %s117
    %p123 = scmp.eq.s32.totalorder %s9, 0
    %p124 = por %p122, %p123
    %p125 = scmp.ne.s32.totalorder %s114, %s117
    %p126 = scmp.eq.s32.totalorder %s14, 1
    %p127 = por %p125, %p126
    %p128 = scmp.ne.s32.totalorder %s117, %s118
    %p129 = scmp.eq.s32.totalorder %s14, 0
    %p130 = por %p128, %p129
    %p131 = scmp.ne.s32.totalorder %s117, %s118
    %p132 = scmp.eq.s32.totalorder %s15, 1
    %p133 = por %p131, %p132
    %p135 = scmp.ne.s32.totalorder %s118, %s134
    %p136 = scmp.eq.s32.totalorder %s15, 0
    %p137 = por %p135, %p136
    %p138 = scmp.le.s32.totalorder 1, %s9
    %p139 = scmp.lt.s32.totalorder %s9, 3
    %p140 = pnand %p138, %p139
    %p141 = pneg %p140
    // Predicated region
    $region9: #{rep_n31_forward.1} parent=5 // pred_check
      _
    $region10: #{rep_n31_forward.1} parent=5 // pred_check_branch
      %143 = sbr.rel (%p140) target = $region12
    $region11: #{rep_n31_forward.1} parent=5 // pred_region
      %s144 = ssub.s32 %s9, 1
      // Predicated region
      $region13: #{rep_n31_forward.1} parent=11 // pred_check
        %p145 = pneg %p79
      $region14: #{rep_n31_forward.1} parent=11 // pred_check_branch
        %147 = sbr.rel (%p145) target = $region16
      $region15: #{rep_n31_forward.1} parent=11 // pred_region
        _
      $region16: #{rep_n31_forward.1} parent=11 // pred_fallthru
        _
      // Predicated region
      $region17: #{rep_n31_forward.1} parent=11 // pred_check
        %p148 = pneg %p100
      $region18: #{rep_n31_forward.1} parent=11 // pred_check_branch
        %150 = sbr.rel (%p148) target = $region20
      $region19: #{rep_n31_forward.1} parent=11 // pred_region
        _
      $region20: #{rep_n31_forward.1} parent=11 // pred_fallthru
        _
    $region12: #{rep_n31_forward.1} parent=5 // pred_fallthru
      _
    %p151 = scmp.lt.s32.totalorder %s9, 2
    // Predicated region
    $region21: #{rep_n31_forward.1} parent=5 // pred_check
      %p152 = pneg %p151
    $region22: #{rep_n31_forward.1} parent=5 // pred_check_branch
      %154 = sbr.rel (%p152) target = $region24
    $region23: #{rep_n31_forward.1} parent=5 // pred_region
      // Predicated region
      $region25: #{rep_n31_forward.1} parent=23 // pred_check
        %p155 = pneg %p52
      $region26: #{rep_n31_forward.1} parent=23 // pred_check_branch
        %157 = sbr.rel (%p155) target = $region28
      $region27: #{rep_n31_forward.1} parent=23 // pred_region
        %s158 = smul.u32 2, %s18
        %p159 = scmp.lt.s32.totalorder %s16, 1
        %s160 = scalar_select %p159, %s16, 1
        %p161 = scmp.lt.s32.totalorder %s17, 0
        %s162 = scalar_select %p161, %s17, 0
        %p163 = scmp.lt.s32.totalorder %s158, 1
        %s164 = scalar_select %p163, %s158, 1
        %s165 = smul.addr %s164, 2
        %s166 = smul.addr %s162, 4
        %s167 = sadd.s32 %s165, %s166
        %s168 = smul.addr %s160, 4
        %s169 = sadd.s32 %s167, %s168
        %s170 = smul.addr %s169, 4
        %s171 = scalar_lea.vmem %s0, %s170
        %s172 = smul.u32 2, %s18
      $region28: #{rep_n31_forward.1} parent=23 // pred_fallthru
        _
    $region24: #{rep_n31_forward.1} parent=5 // pred_fallthru
      _
    %p173 = scmp.le.s32.totalorder 1, %s9
    %p174 = scmp.lt.s32.totalorder %s9, 3
    %p175 = pnand %p173, %p174
    %p176 = pneg %p175
    // Predicated region
    $region29: #{rep_n31_forward.1} parent=5 // pred_check
      _
    $region30: #{rep_n31_forward.1} parent=5 // pred_check_branch
      %178 = sbr.rel (%p175) target = $region32
    $region31: #{rep_n31_forward.1} parent=5 // pred_region
      %s179 = ssub.s32 %s9, 1
      %s180 = smul.u32 2, %s21
      %p181 = scmp.lt.s32.totalorder %s19, 1
      %s182 = scalar_select %p181, %s19, 1
      %p183 = scmp.lt.s32.totalorder %s20, 0
      %s184 = scalar_select %p183, %s20, 0
      %p185 = scmp.lt.s32.totalorder %s180, 1
      %s186 = scalar_select %p185, %s180, 1
      %s187 = smul.addr %s186, 2
      %s188 = smul.addr %s184, 4
      %s189 = sadd.s32 %s187, %s188
      %s190 = smul.addr %s182, 4
      %s191 = sadd.s32 %s189, %s190
      %s192 = smul.addr %s191, 4
      %s193 = scalar_lea.vmem %s0, %s192
      %p194 = pneg %p58
      %p195 = pneg %p55
      %p196 = pneg %p79
      %p197 = pneg %p76
      %p198 = pneg %p100
      %p199 = pneg %p97
      %p200 = pneg %p130
      %p201 = pneg %p127
      %s202 = smul.u32 2, %s21
      %p203 = scmp.lt.s32.totalorder %s19, 1
      %s204 = scalar_select %p203, %s19, 1
      %p205 = scmp.lt.s32.totalorder %s20, 0
      %s206 = scalar_select %p205, %s20, 0
      %p207 = scmp.lt.s32.totalorder %s202, 1
      %s208 = scalar_select %p207, %s202, 1
      %s209 = smul.addr %s206, 2
      %s210 = sadd.s32 %s208, %s209
      %s211 = smul.addr %s204, 2
      %s212 = sadd.s32 %s210, %s211
      %s213 = smul.addr %s212, 4
      %s214 = scalar_lea.vmem %s3, %s213
      %s215 = smul.u32 2, %s21
      %p216 = scmp.lt.s32.totalorder %s19, 1
      %s217 = scalar_select %p216, %s19, 1
      %p218 = scmp.lt.s32.totalorder %s20, 0
      %s219 = scalar_select %p218, %s20, 0
      %p220 = scmp.lt.s32.totalorder %s215, 1
      %s221 = scalar_select %p220, %s215, 1
      %s222 = smul.addr %s221, 2
      %s223 = smul.addr %s219, 4
      %s224 = sadd.s32 %s222, %s223
      %s225 = smul.addr %s217, 4
      %s226 = sadd.s32 %s224, %s225
      %s227 = smul.addr %s226, 4
      %s228 = scalar_lea.vmem %s0, %s227
      %s229 = smul.u32 2, %s21
      %s230 = smul.u32 2, %s21
      %p231 = scmp.lt.s32.totalorder %s19, 1
      %s232 = scalar_select %p231, %s19, 1
      %p233 = scmp.lt.s32.totalorder %s20, 0
      %s234 = scalar_select %p233, %s20, 0
      %p235 = scmp.lt.s32.totalorder %s230, 1
      %s236 = scalar_select %p235, %s230, 1
      %s237 = smul.addr %s234, 2
      %s238 = sadd.s32 %s236, %s237
      %s239 = smul.addr %s232, 2
      %s240 = sadd.s32 %s238, %s239
      %s241 = smul.addr %s240, 4
      %s242 = scalar_lea.vmem %s3, %s241
      %s243 = smul.u32 2, %s21
      %v245 = vld [vmem:[%s228] sm:$0xff]
      %v246 = vld [vmem:[%s228 + $0x8] sm:$0xff]
      %v247 = vld [vmem:[%s1] sm:$0xf]
      %v248 = vld [vmem:[%s1 + $0x4] sm:$0xf]
      %v249 = vld [vmem:[%s1 + $0x8] sm:$0xf]
      %v250 = vld [vmem:[%s1 + $0xc] sm:$0xf]
      %v251 = vld [vmem:[%s1 + $0x10] sm:$0xf]
      %v252 = vld [vmem:[%s1 + $0x14] sm:$0xf]
      %v253 = vld [vmem:[%s1 + $0x18] sm:$0xf]
      %v254 = vld [vmem:[%s1 + $0x1c] sm:$0xf]
      %v255 = vld [vmem:[%s1 + $0x20] sm:$0xf]
      %v256 = vld [vmem:[%s1 + $0x24] sm:$0xf]
      %v257 = vld [vmem:[%s1 + $0x28] sm:$0xf]
      %v258 = vld [vmem:[%s1 + $0x2c] sm:$0xf]
      %v259 = vld [vmem:[%s1 + $0x30] sm:$0xf]
      %v260 = vld [vmem:[%s1 + $0x34] sm:$0xf]
      %v261 = vld [vmem:[%s1 + $0x38] sm:$0xf]
      %v262 = vld [vmem:[%s1 + $0x3c] sm:$0xf]
      %v263 = vld [vmem:[%s1 + $0x40] sm:$0xf]
      %v264 = vld [vmem:[%s1 + $0x44] sm:$0xf]
      %v265 = vld [vmem:[%s1 + $0x48] sm:$0xf]
      %v266 = vld [vmem:[%s1 + $0x4c] sm:$0xf]
      %v267 = vld [vmem:[%s1 + $0x50] sm:$0xf]
      %v268 = vld [vmem:[%s1 + $0x54] sm:$0xf]
      %v269 = vld [vmem:[%s1 + $0x58] sm:$0xf]
      %v270 = vld [vmem:[%s1 + $0x5c] sm:$0xf]
      %v271 = vld [vmem:[%s1 + $0x60] sm:$0xf]
      %v272 = vld [vmem:[%s1 + $0x64] sm:$0xf]
      %v273 = vld [vmem:[%s1 + $0x68] sm:$0xf]
      %v274 = vld [vmem:[%s2] sm:$0x1]
      %v276 = vlaneseq
      %v277 = vshrl.u32 %v276, 7
      %v278 = vsub.s32 0, %v277
      %v279 = vrot.slane %v274, %v278
      %v283 = vunpack.c.l.b16 %v245
      %v284 = vunpack.c.h.b16 %v245
      %v285 = vunpack.c.l.b16 %v246
      %v286 = vunpack.c.h.b16 %v246
      %v287 = vpack.c.b16 %v285, %v283
      %v288 = vpack.c.b16 %v286, %v284
      %v317 = vunpack.c.l.b16 %v247
      %v318 = vunpack.c.l.b16 %v248
      %v319 = vunpack.c.l.b16 %v249
      %v320 = vunpack.c.l.b16 %v250
      %v321 = vunpack.c.l.b16 %v251
      %v322 = vunpack.c.l.b16 %v252
      %v323 = vunpack.c.l.b16 %v253
      %v324 = vunpack.c.l.b16 %v254
      %v325 = vunpack.c.l.b16 %v255
      %v326 = vunpack.c.l.b16 %v256
      %v327 = vunpack.c.l.b16 %v257
      %v328 = vunpack.c.l.b16 %v258
      %v329 = vunpack.c.l.b16 %v259
      %v330 = vunpack.c.l.b16 %v260
      %v331 = vunpack.c.l.b16 %v261
      %v332 = vunpack.c.l.b16 %v262
      %v333 = vunpack.c.l.b16 %v263
      %v334 = vunpack.c.l.b16 %v264
      %v335 = vunpack.c.l.b16 %v265
      %v336 = vunpack.c.l.b16 %v266
      %v337 = vunpack.c.l.b16 %v267
      %v338 = vunpack.c.l.b16 %v268
      %v339 = vunpack.c.l.b16 %v269
      %v340 = vunpack.c.l.b16 %v270
      %v341 = vunpack.c.l.b16 %v271
      %v342 = vunpack.c.l.b16 %v272
      %v343 = vunpack.c.l.b16 %v273
      %v344 = vpack.c.b16 %v318, %v317
      %v345 = vpack.c.b16 %v320, %v319
      %v346 = vpack.c.b16 %v322, %v321
      %v347 = vpack.c.b16 %v324, %v323
      %v348 = vpack.c.b16 %v326, %v325
      %v349 = vpack.c.b16 %v328, %v327
      %v350 = vpack.c.b16 %v330, %v329
      %v351 = vpack.c.b16 %v332, %v331
      %v352 = vpack.c.b16 %v334, %v333
      %v353 = vpack.c.b16 %v336, %v335
      %v354 = vpack.c.b16 %v338, %v337
      %v355 = vpack.c.b16 %v340, %v339
      %v356 = vpack.c.b16 %v342, %v341
      %v357 = vpack.c.b16 %v343, %v343
      %vm371 = vcmask 719872
      %v373 = vsel %vm371, %v288, 0
      %vm375 = vcmask 1043456
      %v377 = vsel %vm375, %v357, 0
      %379 = vmatprep.subr.bf16.mxu0 0
      %380 = vmatpush1.bf16.msra.mxu0 %v351
      %381 = vmatprep.subr.bf16.mxu0 0
      %382 = vmatpush1.bf16.msra.mxu0 %v350
      %383 = vmatprep.subr.bf16.mxu0 0
      %384 = vmatpush1.bf16.msra.mxu0 %v349
      %385 = vmatprep.subr.bf16.mxu0 0
      %386 = vmatpush1.bf16.msra.mxu0 %v348
      %387 = vmatprep.subr.bf16.mxu0 0
      %388 = vmatpush1.bf16.msra.mxu0 %v347
      %389 = vmatprep.subr.bf16.mxu0 0
      %390 = vmatpush1.bf16.msra.mxu0 %v346
      %391 = vmatprep.subr.bf16.mxu0 0
      %392 = vmatpush1.bf16.msra.mxu0 %v345
      %393 = vmatprep.subr.bf16.mxu0 0
      %394 = vmatpush1.bf16.msra.mxu0 %v344
      %395 = vmatprep.subr.bf16.mxu0 0
      %396 = vmatpush2.bf16.msra.mxu0 0
      %397 = vmatprep.subr.bf16.mxu0 0
      %398 = vmatpush2.bf16.msra.mxu0 0
      %399 = vmatprep.subr.bf16.mxu0 0
      %400 = vmatpush2.bf16.msra.mxu0 %v377
      %401 = vmatprep.subr.bf16.mxu0 0
      %402 = vmatpush2.bf16.msra.mxu0 %v356
      %403 = vmatprep.subr.bf16.mxu0 0
      %404 = vmatpush2.bf16.msra.mxu0 %v355
      %405 = vmatprep.subr.bf16.mxu0 0
      %406 = vmatpush2.bf16.msra.mxu0 %v354
      %407 = vmatprep.subr.bf16.mxu0 0
      %408 = vmatpush2.bf16.msra.mxu0 %v353
      %409 = vmatprep.subr.bf16.mxu0 0
      %410 = vmatpush2.bf16.msra.mxu0 %v352
      %411 = vmatprep.mubr.bf16.mxu0 %v373
      %412 = vmatmul.mubr.bf16.gmra.mxu0 %v287
      %v413 = vpop.f32.mrf.mxu0
      %v414 = vadd.f32 %v279, %v413
      %v415 = vpop.f32.mrf.mxu0
      %v416 = vpop.f32.mrf.mxu0
      %v417 = vadd.f32 %v279, %v416
      %v418 = vpop.f32.mrf.mxu0
      %419 = vdwg.mxu0
      %v420 = vmax.f32 %v414, 0.0
      %v421 = vmax.f32 %v417, 0.0
      %v422 = vpack.c.bf16 %v421, %v420
      %v424 = vunpack.c.l.b16 %v422
      %v425 = vunpack.c.h.b16 %v422
      %v426 = vpack.c.b16 %v424, %v424
      %v427 = vpack.c.b16 %v425, %v425
      %430 = vst [vmem:[%s242] sm:$0xf] %v426
      %431 = vst [vmem:[%s242 + $0x4] sm:$0xf] %v427
      %s432 = smul.u32 2, %s21
      %p433 = scmp.lt.s32.totalorder %s19, 1
      %s434 = scalar_select %p433, %s19, 1
      %p435 = scmp.lt.s32.totalorder %s20, 0
      %s436 = scalar_select %p435, %s20, 0
      %p437 = scmp.lt.s32.totalorder %s432, 1
      %s438 = scalar_select %p437, %s432, 1
      %s439 = smul.addr %s436, 2
      %s440 = sadd.s32 %s438, %s439
      %s441 = smul.addr %s434, 2
      %s442 = sadd.s32 %s440, %s441
      %s443 = smul.addr %s442, 4
      %s444 = scalar_lea.vmem %s3, %s443
      // Predicated region
      $region33: #{rep_n31_forward.1} parent=31 // pred_check
        %p445 = pneg %p127
      $region34: #{rep_n31_forward.1} parent=31 // pred_check_branch
        %447 = sbr.rel (%p445) target = $region36
      $region35: #{rep_n31_forward.1} parent=31 // pred_region
        %s448 = smul.u32 2, %s21
      $region36: #{rep_n31_forward.1} parent=31 // pred_fallthru
        _
    $region32: #{rep_n31_forward.1} parent=5 // pred_fallthru
      _
    %p449 = scmp.le.s32.totalorder 2, %s9
    // Predicated region
    $region37: #{rep_n31_forward.1} parent=5 // pred_check
      %p450 = pneg %p449
    $region38: #{rep_n31_forward.1} parent=5 // pred_check_branch
      %452 = sbr.rel (%p450) target = $region40
    $region39: #{rep_n31_forward.1} parent=5 // pred_region
      %s453 = ssub.s32 %s9, 2
      // Predicated region
      $region41: #{rep_n31_forward.1} parent=39 // pred_check
        %p454 = pneg %p133
      $region42: #{rep_n31_forward.1} parent=39 // pred_check_branch
        %456 = sbr.rel (%p454) target = $region44
      $region43: #{rep_n31_forward.1} parent=39 // pred_region
        %s457 = smul.u32 2, %s24
        %p458 = scmp.lt.s32.totalorder %s22, 1
        %s459 = scalar_select %p458, %s22, 1
        %p460 = scmp.lt.s32.totalorder %s23, 0
        %s461 = scalar_select %p460, %s23, 0
        %p462 = scmp.lt.s32.totalorder %s457, 1
        %s463 = scalar_select %p462, %s457, 1
        %s464 = smul.addr %s461, 2
        %s465 = sadd.s32 %s463, %s464
        %s466 = smul.addr %s459, 2
        %s467 = sadd.s32 %s465, %s466
        %s468 = smul.addr %s467, 4
        %s469 = scalar_lea.vmem %s3, %s468
      $region44: #{rep_n31_forward.1} parent=39 // pred_fallthru
        _
    $region40: #{rep_n31_forward.1} parent=5 // pred_fallthru
      _
  $region6: #{rep_n31_forward.1} parent=0 // loop_footer
    %s13 = sadd.s32 1, %s9
  $region7: #{rep_n31_forward.1} parent=0 // loop_footer_branch
    %8 = sbr.rel target = $region3
  $region8: #{rep_n31_forward.1} parent=0 // loop_exit
    _

</llo_original>
